<compile_context>
chip_gen: v7x
topology: tpu7x:2x2x1
jax: 0.10.0
libtpu: 0.0.40
codegen_flags: <defaults>
</compile_context>

<pallas_src>
import jax
import jax.numpy as jnp
from jax import lax
from jax.experimental import pallas as pl
from jax.experimental.pallas import tpu as pltpu

_LANE = 128
_SUBLANE = 8
_NEG_BIG = -1e30  # softmax mask for padded K columns (exp underflows to 0)


def _round_up(a, b):
    return (a + b - 1) // b * b


# ---------------------------------------------------------------------------
# Kernel: tiled GEMM with f32 accumulator + softmax epilogue on last F step.
# ---------------------------------------------------------------------------
def _attention_kernel(x_ref, w_ref, b_ref, o_ref, acc_ref):
    @pl.when(pl.program_id(1) == 0)
    def _init():
        acc_ref[...] = jnp.zeros_like(acc_ref)

    acc_ref[...] += jnp.dot(x_ref[...], w_ref[...],
                            preferred_element_type=jnp.float32)

    @pl.when(pl.program_id(1) == pl.num_programs(1) - 1)
    def _finalize():
        logits = acc_ref[...] + b_ref[...]          # (TN, K_pad), padded K = -1e30
        m = jnp.max(logits, axis=-1, keepdims=True)
        e = jnp.exp(logits - m)
        denom = jnp.sum(e, axis=-1, keepdims=True)
        # Reciprocal on the EUP slot (free relative to VPU work).
        o_ref[...] = (e * pl.reciprocal(denom, approx=True)).astype(o_ref.dtype)


# ---------------------------------------------------------------------------
# Parameter-only preprocessing: fold avgpool(conv3d(.)) into a linear map.
# ---------------------------------------------------------------------------
def _coverage(ksize, pad, size):
    # cover[t, i] = 1 iff input index i is touched by tap t of a stride-1,
    # zero-padded conv with this kernel size / padding.
    t = jnp.arange(ksize, dtype=jnp.int32)[:, None]
    i = jnp.arange(size, dtype=jnp.int32)[None, :]
    lo = t - pad
    return ((i >= lo) & (i < size + lo)).astype(jnp.float32)


def _fold_conv(w, pads, spatial):
    # w: (K, C, kD, kH, kW) -> effective weight field (K, C, D, H, W)
    D, H, W = spatial
    KD, KH, KW = w.shape[2:]
    cd = _coverage(KD, pads[0], D)
    ch = _coverage(KH, pads[1], H)
    cw = _coverage(KW, pads[2], W)
    return jnp.einsum("kcijl,id,jh,lw->kcdhw",
                      w.astype(jnp.float32), cd, ch, cw)


# ---------------------------------------------------------------------------
# Wrapper
# ---------------------------------------------------------------------------
def attention_forward(x, params, *, block_n=256, block_f=2048):
    """Pallas implementation of Attention.forward.  x: (N, C, D, H, W)."""
    N, C, D, H, W = x.shape
    K = params["w1"].shape[0]
    dhw = D * H * W
    feat = C * dhw
    spatial = (D, H, W)

    # Fold all three convs + avgpool into one (feat, K) linear map (1/DHW folded in).
    g = (_fold_conv(params["w1"], (0, 0, 0), spatial)
         + _fold_conv(params["w3"], (1, 1, 1), spatial)
         + _fold_conv(params["w5"], (2, 1, 1), spatial))          # (K, C, D, H, W)
    g = (g * (1.0 / dhw)).reshape(K, feat).T                      # (feat, K)

    # Pad K to a full lane (128) so the matmul / bias / output are lane-dense
    # and the output store is unmasked; padded columns get -1e30 bias.
    k_pad = _round_up(max(K, _LANE), _LANE)
    b = (params["b1"] + params["b3"] + params["b5"]).astype(jnp.float32)
    bias = jnp.full((1, k_pad), _NEG_BIG, jnp.float32).at[0, :K].set(b)

    # Lane-dense activations: (N, C*D*H*W).  x keeps its dtype (bf16 supported);
    # accumulation is f32 inside the kernel.
    x2 = x.reshape(N, feat)

    tn = min(block_n, _round_up(N, _SUBLANE))
    tf = min(block_f, _round_up(feat, _LANE))
    n_pad = _round_up(N, tn)
    f_pad = _round_up(feat, tf)

    if f_pad != feat:
        x2 = jnp.pad(x2, ((0, 0), (0, f_pad - feat)))
    if n_pad != N:
        x2 = jnp.pad(x2, ((0, n_pad - N), (0, 0)))
    gmat = jnp.pad(g, ((0, f_pad - feat), (0, k_pad - K))).astype(x2.dtype)

    grid = (n_pad // tn, f_pad // tf)

    out = pl.pallas_call(
        _attention_kernel,
        out_shape=jax.ShapeDtypeStruct((n_pad, k_pad), jnp.float32),
        grid_spec=pltpu.PrefetchScalarGridSpec(
            num_scalar_prefetch=0,
            grid=grid,
            in_specs=[
                pl.BlockSpec((tn, tf), lambda i, j: (i, j)),      # activations
                pl.BlockSpec((tf, k_pad), lambda i, j: (j, 0)),   # folded weight
                pl.BlockSpec((1, k_pad), lambda i, j: (0, 0)),    # bias (+ K mask)
            ],
            out_specs=pl.BlockSpec((tn, k_pad), lambda i, j: (i, 0)),
            scratch_shapes=[pltpu.VMEM((tn, k_pad), jnp.float32)],
        ),
        compiler_params=pltpu.CompilerParams(
            dimension_semantics=("parallel", "arbitrary"),
            vmem_limit_bytes=32 * 1024 * 1024,
        ),
    )(x2, gmat, bias)

    return out[:N, :K]


# ---------------------------------------------------------------------------
# Pure-JAX reference (mirrors the PyTorch forward) for verification.
# ---------------------------------------------------------------------------
def attention_reference(x, params):
    def conv3d(xx, w, b, pad):
        out = lax.conv_general_dilated(
            xx.astype(jnp.float32), w.astype(jnp.float32),
            window_strides=(1, 1, 1),
            padding=[(p, p) for p in pad],
            dimension_numbers=("NCDHW", "OIDHW", "NCDHW"))
        return out + b.reshape(1, -1, 1, 1, 1)

    x1 = conv3d(x, params["w1"], params["b1"], (0, 0, 0))
    x2 = conv3d(x, params["w3"], params["b3"], (1, 1, 1))
    x3 = conv3d(x, params["w5"], params["b5"], (2, 1, 1))
    xa = (x1.mean(axis=(2, 3, 4)) + x2.mean(axis=(2, 3, 4))
          + x3.mean(axis=(2, 3, 4)))
    return jax.nn.softmax(xa, axis=-1)


if __name__ == "__main__":
    # Small shapes consistent with the module: N=2, in_planes=4, K=5,
    # spatial (D, H, W) = (6, 8, 8).
    N, C, D, H, W = 2, 4, 6, 8, 8
    K = 5

    key = jax.random.PRNGKey(0)
    keys = jax.random.split(key, 7)
    x = jax.random.normal(keys[0], (N, C, D, H, W), jnp.float32)

    def init_conv(kw, kb, kshape):
        fan_in = C * kshape[0] * kshape[1] * kshape[2]
        bound = float(1.0 / (fan_in ** 0.5))  # PyTorch Conv3d default init bounds
        w = jax.random.uniform(kw, (K, C) + kshape, jnp.float32, -bound, bound)
        b = jax.random.uniform(kb, (K,), jnp.float32, -bound, bound)
        return w, b

    w1, b1 = init_conv(keys[1], keys[2], (1, 1, 1))
    w3, b3 = init_conv(keys[3], keys[4], (3, 3, 3))
    w5, b5 = init_conv(keys[5], keys[6], (5, 3, 3))
    params = dict(w1=w1, b1=b1, w3=w3, b3=b3, w5=w5, b5=b5)

    fwd = jax.jit(attention_forward)
    out = jax.block_until_ready(fwd(x, params))
    ref = attention_reference(x, params)

    assert out.shape == (N, K), out.shape
    # Loose-ish atol to cover the EUP approx-reciprocal in the softmax epilogue;
    # any real math bug shows up at the 1e-2..1e-1 level.
    if not jnp.allclose(out, ref, rtol=1e-3, atol=2e-3):
        raise AssertionError(f"mismatch:\npallas={out}\nref={ref}")
    print("KERNEL_OK")
</pallas_src>

<mosaic_0001>
module attributes {stable_mosaic.version = 11 : i64} {
  func.func @_attention_kernel(%arg0: i32, %arg1: i32, %arg2: memref<8x1536xf32, #tpu.memory_space<vmem>>, %arg3: memref<1536x128xf32, #tpu.memory_space<vmem>>, %arg4: memref<1x128xf32, #tpu.memory_space<vmem>>, %arg5: memref<8x128xf32, #tpu.memory_space<vmem>>, %arg6: memref<8x128xf32, #tpu.memory_space<vmem>>) attributes {dimension_semantics = [#tpu.dimension_semantics<parallel>, #tpu.dimension_semantics<arbitrary>], iteration_bounds = array<i64: 1, 1>, scalar_prefetch = 0 : i64, scratch_operands = 1 : i64, tpu.core_type = #tpu.core_type<tc>, window_params = [{transform_indices = @transform_0, window_bounds = array<i64: 8, 1536>}, {transform_indices = @transform_1, window_bounds = array<i64: 1536, 128>}, {pipeline_mode = #tpu.pipeline_mode<synchronous>, transform_indices = @transform_2, window_bounds = array<i64: 1, 128>}, {transform_indices = @transform_3, window_bounds = array<i64: 8, 128>}]} {
    %c0_i32 = arith.constant 0 : i32
    %0 = arith.cmpi eq, %arg1, %c0_i32 : i32
    %1 = arith.extui %0 : i1 to i32
    %c0_i32_0 = arith.constant 0 : i32
    %2 = arith.cmpi ne, %1, %c0_i32_0 : i32
    scf.if %2 {
      %cst_10 = arith.constant 0.000000e+00 : f32
      %12 = vector.broadcast %cst_10 : f32 to vector<8x128xf32>
      %c0_11 = arith.constant 0 : index
      %c0_12 = arith.constant 0 : index
      %13 = vector.load %arg6[%c0_11, %c0_12] : memref<8x128xf32, #tpu.memory_space<vmem>>, vector<8x128xf32>
      tpu.vector_store %arg6[%c0_11, %c0_12], %12 {strides = array<i32>} : memref<8x128xf32, #tpu.memory_space<vmem>>, vector<8x128xf32>,
    } else {
    }
    %c0 = arith.constant 0 : index
    %c0_1 = arith.constant 0 : index
    %3 = vector.load %arg6[%c0, %c0_1] : memref<8x128xf32, #tpu.memory_space<vmem>>, vector<8x128xf32>
    %c0_2 = arith.constant 0 : index
    %c0_3 = arith.constant 0 : index
    %4 = vector.load %arg2[%c0_2, %c0_3] : memref<8x1536xf32, #tpu.memory_space<vmem>>, vector<8x1536xf32>
    %c0_4 = arith.constant 0 : index
    %c0_5 = arith.constant 0 : index
    %5 = vector.load %arg3[%c0_4, %c0_5] : memref<1536x128xf32, #tpu.memory_space<vmem>>, vector<1536x128xf32>
    %cst = arith.constant dense<0.000000e+00> : vector<8x128xf32>
    %6 = tpu.matmul %4, %5, %cst {dimension_numbers = #tpu.dot_dimension_numbers<[1], [0], [0], [1], [0, 0, 1, 1], [], []>} : vector<8x1536xf32>, vector<1536x128xf32>, vector<8x128xf32> -> vector<8x128xf32>
    %7 = arith.addf %3, %6 : vector<8x128xf32>
    %c0_6 = arith.constant 0 : index
    %c0_7 = arith.constant 0 : index
    %8 = vector.load %arg6[%c0_6, %c0_7] : memref<8x128xf32, #tpu.memory_space<vmem>>, vector<8x128xf32>
    tpu.vector_store %arg6[%c0_6, %c0_7], %7 {strides = array<i32>} : memref<8x128xf32, #tpu.memory_space<vmem>>, vector<8x128xf32>,
    %c0_i32_8 = arith.constant 0 : i32
    %9 = arith.cmpi eq, %arg1, %c0_i32_8 : i32
    %10 = arith.extui %9 : i1 to i32
    %c0_i32_9 = arith.constant 0 : i32
    %11 = arith.cmpi ne, %10, %c0_i32_9 : i32
    scf.if %11 {
      %c0_10 = arith.constant 0 : index
      %c0_11 = arith.constant 0 : index
      %12 = vector.load %arg6[%c0_10, %c0_11] : memref<8x128xf32, #tpu.memory_space<vmem>>, vector<8x128xf32>
      %c0_12 = arith.constant 0 : index
      %c0_13 = arith.constant 0 : index
      %13 = vector.load %arg4[%c0_12, %c0_13] : memref<1x128xf32, #tpu.memory_space<vmem>>, vector<1x128xf32>
      %14 = vector.broadcast %13 : vector<1x128xf32> to vector<8x128xf32>
      %15 = arith.addf %12, %14 : vector<8x128xf32>
      %cst_14 = arith.constant dense<0xFF800000> : vector<8xf32>
      %16 = vector.multi_reduction <maximumf>, %15, %cst_14 [1] : vector<8x128xf32> to vector<8xf32>
      %17 = vector.shape_cast %16 : vector<8xf32> to vector<8x1xf32>
      %18 = vector.broadcast %17 : vector<8x1xf32> to vector<8x128xf32>
      %19 = arith.subf %15, %18 : vector<8x128xf32>
      %20 = math.exp %19 : vector<8x128xf32>
      %cst_15 = arith.constant dense<0.000000e+00> : vector<8xf32>
      %21 = vector.multi_reduction <add>, %20, %cst_15 [1] : vector<8x128xf32> to vector<8xf32>
      %22 = vector.shape_cast %21 : vector<8xf32> to vector<8x1xf32>
      %23 = tpu.reciprocal %22 {approx = true} : vector<8x1xf32> -> vector<8x1xf32>
      %24 = vector.broadcast %23 : vector<8x1xf32> to vector<8x128xf32>
      %25 = arith.mulf %20, %24 : vector<8x128xf32>
      %c0_16 = arith.constant 0 : index
      %c0_17 = arith.constant 0 : index
      %26 = vector.load %arg5[%c0_16, %c0_17] : memref<8x128xf32, #tpu.memory_space<vmem>>, vector<8x128xf32>
      tpu.vector_store %arg5[%c0_16, %c0_17], %25 {strides = array<i32>} : memref<8x128xf32, #tpu.memory_space<vmem>>, vector<8x128xf32>,
    } else {
    }
    return
  }
  func.func @transform_0(%arg0: i32, %arg1: i32) -> (i32, i32) {
    %c0_i32 = arith.constant 0 : i32
    return %arg0, %arg1 : i32, i32
  }
  func.func @transform_1(%arg0: i32, %arg1: i32) -> (i32, i32) {
    %c0_i32 = arith.constant 0 : i32
    %c0_i32_0 = arith.constant 0 : i32
    return %arg1, %c0_i32 : i32, i32
  }
  func.func @transform_2(%arg0: i32, %arg1: i32) -> (i32, i32) {
    %c0_i32 = arith.constant 0 : i32
    %c0_i32_0 = arith.constant 0 : i32
    %c0_i32_1 = arith.constant 0 : i32
    return %c0_i32, %c0_i32_0 : i32, i32
  }
  func.func @transform_3(%arg0: i32, %arg1: i32) -> (i32, i32) {
    %c0_i32 = arith.constant 0 : i32
    %c0_i32_0 = arith.constant 0 : i32
    return %arg0, %c0_i32 : i32, i32
  }
}

</mosaic_0001>

<llo_original>
// kernel: attention_forward.1
$region0: #{attention_forward.1}
  #allocation0 [shape = 'u32[]', space=smem, size = 0x4, offset = 0x4, fixed_abs, tag = 'smem constant byte address 0x4 - core index']
  #allocation1 [shape = 'u32[144,128]{1,0:T(1,128)}', space=vmem, size = 0x12000, scoped, tag = 'internal scratch']
  #allocation2 [shape = 'f32[8,128]{1,0:T(8,128)}', space=vmem, size = 0x1000, scoped, tag = 'scratch operand']
  %s0 = inlined_call_operand.vmem [shape: f32[8,1536], index: 0, kind: input, shape index: {}]
  %s1 = inlined_call_operand.vmem [shape: f32[1536,128], index: 1, kind: input, shape index: {}]
  %s2 = inlined_call_operand.vmem [shape: f32[1,128], index: 2, kind: input, shape index: {}]
  %s3 = inlined_call_operand.vmem [shape: f32[8,128], index: 3, kind: output, shape index: {}]
  %s4 = sld [smem:[#allocation0]]
  $region30: #{attention_forward.1} parent=0
    _
  %s6 = ssub.s32 1, %s4
  %s7 = scalar_select 0, %s6, %s4
  // Predicated region
  $region2: #{attention_forward.1} parent=0 // pred_check
    _
  $region3: #{attention_forward.1} parent=0 // pred_check_branch
    %9 = sbr.rel (0) target = $region5
  $region4: #{attention_forward.1} parent=0 // pred_region
    _
  $region5: #{attention_forward.1} parent=0 // pred_fallthru
    _
  // Predicated region
  $region6: #{attention_forward.1} parent=0 // pred_check
    _
  $region7: #{attention_forward.1} parent=0 // pred_check_branch
    %11 = sbr.rel (0) target = $region9
  $region8: #{attention_forward.1} parent=0 // pred_region
    _
  $region9: #{attention_forward.1} parent=0 // pred_fallthru
    _
  // Predicated region
  $region10: #{attention_forward.1} parent=0 // pred_check
    _
  $region11: #{attention_forward.1} parent=0 // pred_check_branch
    %13 = sbr.rel (0) target = $region13
  $region12: #{attention_forward.1} parent=0 // pred_region
    _
  $region13: #{attention_forward.1} parent=0 // pred_fallthru
    _
  %p14 = scmp.eq.s32.totalorder 0, 0
  // Predicated region
  $region14: #{attention_forward.1} parent=0 // pred_check
    %p15 = pneg %p14
  $region15: #{attention_forward.1} parent=0 // pred_check_branch
    %17 = sbr.rel (%p15) target = $region17
  $region16: #{attention_forward.1} parent=0 // pred_region
    %18 = vst [vmem:[#allocation2] sm:$0xff] 0.0
  $region17: #{attention_forward.1} parent=0 // pred_fallthru
    _
  %v19 = vld [vmem:[#allocation2] sm:$0xff]
  %v20 = vld [vmem:[%s0] sm:$0xff]
  %v21 = vld [vmem:[%s0 + $0x8] sm:$0xff]
  %v22 = vld [vmem:[%s0 + $0x10] sm:$0xff]
  %v23 = vld [vmem:[%s0 + $0x18] sm:$0xff]
  %v24 = vld [vmem:[%s0 + $0x20] sm:$0xff]
  %v25 = vld [vmem:[%s0 + $0x28] sm:$0xff]
  %v26 = vld [vmem:[%s0 + $0x30] sm:$0xff]
  %v27 = vld [vmem:[%s0 + $0x38] sm:$0xff]
  %v28 = vld [vmem:[%s0 + $0x40] sm:$0xff]
  %v29 = vld [vmem:[%s0 + $0x48] sm:$0xff]
  %v30 = vld [vmem:[%s0 + $0x50] sm:$0xff]
  %v31 = vld [vmem:[%s0 + $0x58] sm:$0xff]
  %v32 = vld [vmem:[%s1] sm:$0xff]
  %v33 = vld [vmem:[%s1 + $0x8] sm:$0xff]
  %v34 = vld [vmem:[%s1 + $0x10] sm:$0xff]
  %v35 = vld [vmem:[%s1 + $0x18] sm:$0xff]
  %v36 = vld [vmem:[%s1 + $0x20] sm:$0xff]
  %v37 = vld [vmem:[%s1 + $0x28] sm:$0xff]
  %v38 = vld [vmem:[%s1 + $0x30] sm:$0xff]
  %v39 = vld [vmem:[%s1 + $0x38] sm:$0xff]
  %v40 = vld [vmem:[%s1 + $0x40] sm:$0xff]
  %v41 = vld [vmem:[%s1 + $0x48] sm:$0xff]
  %v42 = vld [vmem:[%s1 + $0x50] sm:$0xff]
  %v43 = vld [vmem:[%s1 + $0x58] sm:$0xff]
  %v44 = vld [vmem:[%s1 + $0x60] sm:$0xff]
  %v45 = vld [vmem:[%s1 + $0x68] sm:$0xff]
  %v46 = vld [vmem:[%s1 + $0x70] sm:$0xff]
  %v47 = vld [vmem:[%s1 + $0x78] sm:$0xff]
  %v48 = vld [vmem:[%s1 + $0x80] sm:$0xff]
  %v49 = vld [vmem:[%s1 + $0x88] sm:$0xff]
  %v50 = vld [vmem:[%s1 + $0x90] sm:$0xff]
  %v51 = vld [vmem:[%s1 + $0x98] sm:$0xff]
  %v52 = vld [vmem:[%s1 + $0xa0] sm:$0xff]
  %v53 = vld [vmem:[%s1 + $0xa8] sm:$0xff]
  %v54 = vld [vmem:[%s1 + $0xb0] sm:$0xff]
  %v55 = vld [vmem:[%s1 + $0xb8] sm:$0xff]
  %v56 = vld [vmem:[%s1 + $0xc0] sm:$0xff]
  %v57 = vld [vmem:[%s1 + $0xc8] sm:$0xff]
  %v58 = vld [vmem:[%s1 + $0xd0] sm:$0xff]
  %v59 = vld [vmem:[%s1 + $0xd8] sm:$0xff]
  %v60 = vld [vmem:[%s1 + $0xe0] sm:$0xff]
  %v61 = vld [vmem:[%s1 + $0xe8] sm:$0xff]
  %v62 = vld [vmem:[%s1 + $0xf0] sm:$0xff]
  %v63 = vld [vmem:[%s1 + $0xf8] sm:$0xff]
  %v64 = vld [vmem:[%s1 + $0x100] sm:$0xff]
  %v65 = vld [vmem:[%s1 + $0x108] sm:$0xff]
  %v66 = vld [vmem:[%s1 + $0x110] sm:$0xff]
  %v67 = vld [vmem:[%s1 + $0x118] sm:$0xff]
  %v68 = vld [vmem:[%s1 + $0x120] sm:$0xff]
  %v69 = vld [vmem:[%s1 + $0x128] sm:$0xff]
  %v70 = vld [vmem:[%s1 + $0x130] sm:$0xff]
  %v71 = vld [vmem:[%s1 + $0x138] sm:$0xff]
  %v72 = vld [vmem:[%s1 + $0x140] sm:$0xff]
  %v73 = vld [vmem:[%s1 + $0x148] sm:$0xff]
  %v74 = vld [vmem:[%s1 + $0x150] sm:$0xff]
  %v75 = vld [vmem:[%s1 + $0x158] sm:$0xff]
  %v76 = vld [vmem:[%s1 + $0x160] sm:$0xff]
  %v77 = vld [vmem:[%s1 + $0x168] sm:$0xff]
  %v78 = vld [vmem:[%s1 + $0x170] sm:$0xff]
  %v79 = vld [vmem:[%s1 + $0x178] sm:$0xff]
  %v80 = vld [vmem:[%s1 + $0x180] sm:$0xff]
  %v81 = vld [vmem:[%s1 + $0x188] sm:$0xff]
  %v82 = vld [vmem:[%s1 + $0x190] sm:$0xff]
  %v83 = vld [vmem:[%s1 + $0x198] sm:$0xff]
  %v84 = vld [vmem:[%s1 + $0x1a0] sm:$0xff]
  %v85 = vld [vmem:[%s1 + $0x1a8] sm:$0xff]
  %v86 = vld [vmem:[%s1 + $0x1b0] sm:$0xff]
  %v87 = vld [vmem:[%s1 + $0x1b8] sm:$0xff]
  %v88 = vld [vmem:[%s1 + $0x1c0] sm:$0xff]
  %v89 = vld [vmem:[%s1 + $0x1c8] sm:$0xff]
  %v90 = vld [vmem:[%s1 + $0x1d0] sm:$0xff]
  %v91 = vld [vmem:[%s1 + $0x1d8] sm:$0xff]
  %v92 = vld [vmem:[%s1 + $0x1e0] sm:$0xff]
  %v93 = vld [vmem:[%s1 + $0x1e8] sm:$0xff]
  %v94 = vld [vmem:[%s1 + $0x1f0] sm:$0xff]
  %v95 = vld [vmem:[%s1 + $0x1f8] sm:$0xff]
  %v96 = vld [vmem:[%s1 + $0x200] sm:$0xff]
  %v97 = vld [vmem:[%s1 + $0x208] sm:$0xff]
  %v98 = vld [vmem:[%s1 + $0x210] sm:$0xff]
  %v99 = vld [vmem:[%s1 + $0x218] sm:$0xff]
  %v100 = vld [vmem:[%s1 + $0x220] sm:$0xff]
  %v101 = vld [vmem:[%s1 + $0x228] sm:$0xff]
  %v102 = vld [vmem:[%s1 + $0x230] sm:$0xff]
  %v103 = vld [vmem:[%s1 + $0x238] sm:$0xff]
  %v104 = vld [vmem:[%s1 + $0x240] sm:$0xff]
  %v105 = vld [vmem:[%s1 + $0x248] sm:$0xff]
  %v106 = vld [vmem:[%s1 + $0x250] sm:$0xff]
  %v107 = vld [vmem:[%s1 + $0x258] sm:$0xff]
  %v108 = vld [vmem:[%s1 + $0x260] sm:$0xff]
  %v109 = vld [vmem:[%s1 + $0x268] sm:$0xff]
  %v110 = vld [vmem:[%s1 + $0x270] sm:$0xff]
  %v111 = vld [vmem:[%s1 + $0x278] sm:$0xff]
  %v112 = vld [vmem:[%s1 + $0x280] sm:$0xff]
  %v113 = vld [vmem:[%s1 + $0x288] sm:$0xff]
  %v114 = vld [vmem:[%s1 + $0x290] sm:$0xff]
  %v115 = vld [vmem:[%s1 + $0x298] sm:$0xff]
  %v116 = vld [vmem:[%s1 + $0x2a0] sm:$0xff]
  %v117 = vld [vmem:[%s1 + $0x2a8] sm:$0xff]
  %v118 = vld [vmem:[%s1 + $0x2b0] sm:$0xff]
  %v119 = vld [vmem:[%s1 + $0x2b8] sm:$0xff]
  %v120 = vld [vmem:[%s1 + $0x2c0] sm:$0xff]
  %v121 = vld [vmem:[%s1 + $0x2c8] sm:$0xff]
  %v122 = vld [vmem:[%s1 + $0x2d0] sm:$0xff]
  %v123 = vld [vmem:[%s1 + $0x2d8] sm:$0xff]
  %v124 = vld [vmem:[%s1 + $0x2e0] sm:$0xff]
  %v125 = vld [vmem:[%s1 + $0x2e8] sm:$0xff]
  %v126 = vld [vmem:[%s1 + $0x2f0] sm:$0xff]
  %v127 = vld [vmem:[%s1 + $0x2f8] sm:$0xff]
  %v128 = vld [vmem:[%s1 + $0x300] sm:$0xff]
  %v129 = vld [vmem:[%s1 + $0x308] sm:$0xff]
  %v130 = vld [vmem:[%s1 + $0x310] sm:$0xff]
  %v131 = vld [vmem:[%s1 + $0x318] sm:$0xff]
  %v132 = vld [vmem:[%s1 + $0x320] sm:$0xff]
  %v133 = vld [vmem:[%s1 + $0x328] sm:$0xff]
  %v134 = vld [vmem:[%s1 + $0x330] sm:$0xff]
  %v135 = vld [vmem:[%s1 + $0x338] sm:$0xff]
  %v136 = vld [vmem:[%s1 + $0x340] sm:$0xff]
  %v137 = vld [vmem:[%s1 + $0x348] sm:$0xff]
  %v138 = vld [vmem:[%s1 + $0x350] sm:$0xff]
  %v139 = vld [vmem:[%s1 + $0x358] sm:$0xff]
  %v140 = vld [vmem:[%s1 + $0x360] sm:$0xff]
  %v141 = vld [vmem:[%s1 + $0x368] sm:$0xff]
  %v142 = vld [vmem:[%s1 + $0x370] sm:$0xff]
  %v143 = vld [vmem:[%s1 + $0x378] sm:$0xff]
  %v144 = vld [vmem:[%s1 + $0x380] sm:$0xff]
  %v145 = vld [vmem:[%s1 + $0x388] sm:$0xff]
  %v146 = vld [vmem:[%s1 + $0x390] sm:$0xff]
  %v147 = vld [vmem:[%s1 + $0x398] sm:$0xff]
  %v148 = vld [vmem:[%s1 + $0x3a0] sm:$0xff]
  %v149 = vld [vmem:[%s1 + $0x3a8] sm:$0xff]
  %v150 = vld [vmem:[%s1 + $0x3b0] sm:$0xff]
  %v151 = vld [vmem:[%s1 + $0x3b8] sm:$0xff]
  %v152 = vld [vmem:[%s1 + $0x3c0] sm:$0xff]
  %v153 = vld [vmem:[%s1 + $0x3c8] sm:$0xff]
  %v154 = vld [vmem:[%s1 + $0x3d0] sm:$0xff]
  %v155 = vld [vmem:[%s1 + $0x3d8] sm:$0xff]
  %v156 = vld [vmem:[%s1 + $0x3e0] sm:$0xff]
  %v157 = vld [vmem:[%s1 + $0x3e8] sm:$0xff]
  %v158 = vld [vmem:[%s1 + $0x3f0] sm:$0xff]
  %v159 = vld [vmem:[%s1 + $0x3f8] sm:$0xff]
  %v160 = vld [vmem:[%s1 + $0x400] sm:$0xff]
  %v161 = vld [vmem:[%s1 + $0x408] sm:$0xff]
  %v162 = vld [vmem:[%s1 + $0x410] sm:$0xff]
  %v163 = vld [vmem:[%s1 + $0x418] sm:$0xff]
  %v164 = vld [vmem:[%s1 + $0x420] sm:$0xff]
  %v165 = vld [vmem:[%s1 + $0x428] sm:$0xff]
  %v166 = vld [vmem:[%s1 + $0x430] sm:$0xff]
  %v167 = vld [vmem:[%s1 + $0x438] sm:$0xff]
  %v168 = vld [vmem:[%s1 + $0x440] sm:$0xff]
  %v169 = vld [vmem:[%s1 + $0x448] sm:$0xff]
  %v170 = vld [vmem:[%s1 + $0x450] sm:$0xff]
  %v171 = vld [vmem:[%s1 + $0x458] sm:$0xff]
  %v172 = vld [vmem:[%s1 + $0x460] sm:$0xff]
  %v173 = vld [vmem:[%s1 + $0x468] sm:$0xff]
  %v174 = vld [vmem:[%s1 + $0x470] sm:$0xff]
  %v175 = vld [vmem:[%s1 + $0x478] sm:$0xff]
  %v176 = vld [vmem:[%s1 + $0x480] sm:$0xff]
  %v177 = vld [vmem:[%s1 + $0x488] sm:$0xff]
  %v178 = vld [vmem:[%s1 + $0x490] sm:$0xff]
  %v179 = vld [vmem:[%s1 + $0x498] sm:$0xff]
  %v180 = vld [vmem:[%s1 + $0x4a0] sm:$0xff]
  %v181 = vld [vmem:[%s1 + $0x4a8] sm:$0xff]
  %v182 = vld [vmem:[%s1 + $0x4b0] sm:$0xff]
  %v183 = vld [vmem:[%s1 + $0x4b8] sm:$0xff]
  %v184 = vld [vmem:[%s1 + $0x4c0] sm:$0xff]
  %v185 = vld [vmem:[%s1 + $0x4c8] sm:$0xff]
  %v186 = vld [vmem:[%s1 + $0x4d0] sm:$0xff]
  %v187 = vld [vmem:[%s1 + $0x4d8] sm:$0xff]
  %v188 = vld [vmem:[%s1 + $0x4e0] sm:$0xff]
  %v189 = vld [vmem:[%s1 + $0x4e8] sm:$0xff]
  %v190 = vld [vmem:[%s1 + $0x4f0] sm:$0xff]
  %v191 = vld [vmem:[%s1 + $0x4f8] sm:$0xff]
  %v192 = vld [vmem:[%s1 + $0x500] sm:$0xff]
  %v193 = vld [vmem:[%s1 + $0x508] sm:$0xff]
  %v194 = vld [vmem:[%s1 + $0x510] sm:$0xff]
  %v195 = vld [vmem:[%s1 + $0x518] sm:$0xff]
  %v196 = vld [vmem:[%s1 + $0x520] sm:$0xff]
  %v197 = vld [vmem:[%s1 + $0x528] sm:$0xff]
  %v198 = vld [vmem:[%s1 + $0x530] sm:$0xff]
  %v199 = vld [vmem:[%s1 + $0x538] sm:$0xff]
  %v200 = vld [vmem:[%s1 + $0x540] sm:$0xff]
  %v201 = vld [vmem:[%s1 + $0x548] sm:$0xff]
  %v202 = vld [vmem:[%s1 + $0x550] sm:$0xff]
  %v203 = vld [vmem:[%s1 + $0x558] sm:$0xff]
  %v204 = vld [vmem:[%s1 + $0x560] sm:$0xff]
  %v205 = vld [vmem:[%s1 + $0x568] sm:$0xff]
  %v206 = vld [vmem:[%s1 + $0x570] sm:$0xff]
  %v207 = vld [vmem:[%s1 + $0x578] sm:$0xff]
  %v208 = vld [vmem:[%s1 + $0x580] sm:$0xff]
  %v209 = vld [vmem:[%s1 + $0x588] sm:$0xff]
  %v210 = vld [vmem:[%s1 + $0x590] sm:$0xff]
  %v211 = vld [vmem:[%s1 + $0x598] sm:$0xff]
  %v212 = vld [vmem:[%s1 + $0x5a0] sm:$0xff]
  %v213 = vld [vmem:[%s1 + $0x5a8] sm:$0xff]
  %v214 = vld [vmem:[%s1 + $0x5b0] sm:$0xff]
  %v215 = vld [vmem:[%s1 + $0x5b8] sm:$0xff]
  %v216 = vld [vmem:[%s1 + $0x5c0] sm:$0xff]
  %v217 = vld [vmem:[%s1 + $0x5c8] sm:$0xff]
  %v218 = vld [vmem:[%s1 + $0x5d0] sm:$0xff]
  %v219 = vld [vmem:[%s1 + $0x5d8] sm:$0xff]
  %v220 = vld [vmem:[%s1 + $0x5e0] sm:$0xff]
  %v221 = vld [vmem:[%s1 + $0x5e8] sm:$0xff]
  %v222 = vld [vmem:[%s1 + $0x5f0] sm:$0xff]
  %v223 = vld [vmem:[%s1 + $0x5f8] sm:$0xff]
  %224 = vmatprep.subr.mxu0 0.0
  %225 = vmatpush1.msra.mxu0 %v32
  %226 = vmatprep.subr.mxu0 0.0
  %227 = vmatpush1.msra.mxu0 %v33
  %228 = vmatprep.subr.mxu0 0.0
  %229 = vmatpush1.msra.mxu0 %v34
  %230 = vmatprep.subr.mxu0 0.0
  %231 = vmatpush1.msra.mxu0 %v35
  %232 = vmatprep.subr.mxu0 0.0
  %233 = vmatpush1.msra.mxu0 %v36
  %234 = vmatprep.subr.mxu0 0.0
  %235 = vmatpush1.msra.mxu0 %v37
  %236 = vmatprep.subr.mxu0 0.0
  %237 = vmatpush1.msra.mxu0 %v38
  %238 = vmatprep.subr.mxu0 0.0
  %239 = vmatpush1.msra.mxu0 %v39
  %240 = vmatprep.subr.mxu0 0.0
  %241 = vmatpush1.msra.mxu0 %v40
  %242 = vmatprep.subr.mxu0 0.0
  %243 = vmatpush1.msra.mxu0 %v41
  %244 = vmatprep.subr.mxu0 0.0
  %245 = vmatpush1.msra.mxu0 %v42
  %246 = vmatprep.subr.mxu0 0.0
  %247 = vmatpush1.msra.mxu0 %v43
  %248 = vmatprep.subr.mxu0 0.0
  %249 = vmatpush1.msra.mxu0 %v44
  %250 = vmatprep.subr.mxu0 0.0
  %251 = vmatpush1.msra.mxu0 %v45
  %252 = vmatprep.subr.mxu0 0.0
  %253 = vmatpush1.msra.mxu0 %v46
  %254 = vmatprep.subr.mxu0 0.0
  %255 = vmatpush1.msra.mxu0 %v47
  %256 = vmatprep.subr.mxu0 0.0
  %257 = vmatpush1.msra.mxu0 %v48
  %258 = vmatprep.subr.mxu0 0.0
  %259 = vmatpush1.msra.mxu0 %v49
  %260 = vmatprep.subr.mxu0 0.0
  %261 = vmatpush1.msra.mxu0 %v50
  %262 = vmatprep.subr.mxu0 0.0
  %263 = vmatpush1.msra.mxu0 %v51
  %264 = vmatprep.subr.mxu0 0.0
  %265 = vmatpush1.msra.mxu0 %v52
  %266 = vmatprep.subr.mxu0 0.0
  %267 = vmatpush1.msra.mxu0 %v53
  %268 = vmatprep.subr.mxu0 0.0
  %269 = vmatpush1.msra.mxu0 %v54
  %270 = vmatprep.subr.mxu0 0.0
  %271 = vmatpush1.msra.mxu0 %v55
  %272 = vmatprep.subr.mxu0 0.0
  %273 = vmatpush1.msra.mxu0 %v56
  %274 = vmatprep.subr.mxu0 0.0
  %275 = vmatpush1.msra.mxu0 %v57
  %276 = vmatprep.subr.mxu0 0.0
  %277 = vmatpush1.msra.mxu0 %v58
  %278 = vmatprep.subr.mxu0 0.0
  %279 = vmatpush1.msra.mxu0 %v59
  %280 = vmatprep.subr.mxu0 0.0
  %281 = vmatpush1.msra.mxu0 %v60
  %282 = vmatprep.subr.mxu0 0.0
  %283 = vmatpush1.msra.mxu0 %v61
  %284 = vmatprep.subr.mxu0 0.0
  %285 = vmatpush1.msra.mxu0 %v62
  %286 = vmatprep.subr.mxu0 0.0
  %287 = vmatpush1.msra.mxu0 %v63
  %288 = vmatprep.mubr.f32.mxu0 %v21
  %289 = vmatmul.mubr.f32.gmra.mrb[0].mxu0 %v20
  %v290 = vpop.f32.mrb[0].mxu0
  %v291 = vadd.f32 0.0, %v290
  %v292 = vpop.f32.mrb[0].mxu0
  %293 = vdwg.mxu0
  %294 = vmatprep.subr.mxu0 0.0
  %295 = vmatpush1.msra.mxu0 %v64
  %296 = vmatprep.subr.mxu0 0.0
  %297 = vmatpush1.msra.mxu0 %v65
  %298 = vmatprep.subr.mxu0 0.0
  %299 = vmatpush1.msra.mxu0 %v66
  %300 = vmatprep.subr.mxu0 0.0
  %301 = vmatpush1.msra.mxu0 %v67
  %302 = vmatprep.subr.mxu0 0.0
  %303 = vmatpush1.msra.mxu0 %v68
  %304 = vmatprep.subr.mxu0 0.0
  %305 = vmatpush1.msra.mxu0 %v69
  %306 = vmatprep.subr.mxu0 0.0
  %307 = vmatpush1.msra.mxu0 %v70
  %308 = vmatprep.subr.mxu0 0.0
  %309 = vmatpush1.msra.mxu0 %v71
  %310 = vmatprep.subr.mxu0 0.0
  %311 = vmatpush1.msra.mxu0 %v72
  %312 = vmatprep.subr.mxu0 0.0
  %313 = vmatpush1.msra.mxu0 %v73
  %314 = vmatprep.subr.mxu0 0.0
  %315 = vmatpush1.msra.mxu0 %v74
  %316 = vmatprep.subr.mxu0 0.0
  %317 = vmatpush1.msra.mxu0 %v75
  %318 = vmatprep.subr.mxu0 0.0
  %319 = vmatpush1.msra.mxu0 %v76
  %320 = vmatprep.subr.mxu0 0.0
  %321 = vmatpush1.msra.mxu0 %v77
  %322 = vmatprep.subr.mxu0 0.0
  %323 = vmatpush1.msra.mxu0 %v78
  %324 = vmatprep.subr.mxu0 0.0
  %325 = vmatpush1.msra.mxu0 %v79
  %326 = vmatprep.subr.mxu0 0.0
  %327 = vmatpush1.msra.mxu0 %v80
  %328 = vmatprep.subr.mxu0 0.0
  %329 = vmatpush1.msra.mxu0 %v81
  %330 = vmatprep.subr.mxu0 0.0
  %331 = vmatpush1.msra.mxu0 %v82
  %332 = vmatprep.subr.mxu0 0.0
  %333 = vmatpush1.msra.mxu0 %v83
  %334 = vmatprep.subr.mxu0 0.0
  %335 = vmatpush1.msra.mxu0 %v84
  %336 = vmatprep.subr.mxu0 0.0
  %337 = vmatpush1.msra.mxu0 %v85
  %338 = vmatprep.subr.mxu0 0.0
  %339 = vmatpush1.msra.mxu0 %v86
  %340 = vmatprep.subr.mxu0 0.0
  %341 = vmatpush1.msra.mxu0 %v87
  %342 = vmatprep.subr.mxu0 0.0
  %343 = vmatpush1.msra.mxu0 %v88
  %344 = vmatprep.subr.mxu0 0.0
  %345 = vmatpush1.msra.mxu0 %v89
  %346 = vmatprep.subr.mxu0 0.0
  %347 = vmatpush1.msra.mxu0 %v90
  %348 = vmatprep.subr.mxu0 0.0
  %349 = vmatpush1.msra.mxu0 %v91
  %350 = vmatprep.subr.mxu0 0.0
  %351 = vmatpush1.msra.mxu0 %v92
  %352 = vmatprep.subr.mxu0 0.0
  %353 = vmatpush1.msra.mxu0 %v93
  %354 = vmatprep.subr.mxu0 0.0
  %355 = vmatpush1.msra.mxu0 %v94
  %356 = vmatprep.subr.mxu0 0.0
  %357 = vmatpush1.msra.mxu0 %v95
  %358 = vmatprep.mubr.f32.mxu0 %v23
  %359 = vmatmul.mubr.f32.gmra.mrb[0].mxu0 %v22
  %v360 = vpop.f32.mrb[0].mxu0
  %v361 = vadd.f32 %v291, %v360
  %v362 = vpop.f32.mrb[0].mxu0
  %363 = vdwg.mxu0
  %364 = vmatprep.subr.mxu0 0.0
  %365 = vmatpush1.msra.mxu0 %v96
  %366 = vmatprep.subr.mxu0 0.0
  %367 = vmatpush1.msra.mxu0 %v97
  %368 = vmatprep.subr.mxu0 0.0
  %369 = vmatpush1.msra.mxu0 %v98
  %370 = vmatprep.subr.mxu0 0.0
  %371 = vmatpush1.msra.mxu0 %v99
  %372 = vmatprep.subr.mxu0 0.0
  %373 = vmatpush1.msra.mxu0 %v100
  %374 = vmatprep.subr.mxu0 0.0
  %375 = vmatpush1.msra.mxu0 %v101
  %376 = vmatprep.subr.mxu0 0.0
  %377 = vmatpush1.msra.mxu0 %v102
  %378 = vmatprep.subr.mxu0 0.0
  %379 = vmatpush1.msra.mxu0 %v103
  %380 = vmatprep.subr.mxu0 0.0
  %381 = vmatpush1.msra.mxu0 %v104
  %382 = vmatprep.subr.mxu0 0.0
  %383 = vmatpush1.msra.mxu0 %v105
  %384 = vmatprep.subr.mxu0 0.0
  %385 = vmatpush1.msra.mxu0 %v106
  %386 = vmatprep.subr.mxu0 0.0
  %387 = vmatpush1.msra.mxu0 %v107
  %388 = vmatprep.subr.mxu0 0.0
  %389 = vmatpush1.msra.mxu0 %v108
  %390 = vmatprep.subr.mxu0 0.0
  %391 = vmatpush1.msra.mxu0 %v109
  %392 = vmatprep.subr.mxu0 0.0
  %393 = vmatpush1.msra.mxu0 %v110
  %394 = vmatprep.subr.mxu0 0.0
  %395 = vmatpush1.msra.mxu0 %v111
  %396 = vmatprep.subr.mxu0 0.0
  %397 = vmatpush1.msra.mxu0 %v112
  %398 = vmatprep.subr.mxu0 0.0
  %399 = vmatpush1.msra.mxu0 %v113
  %400 = vmatprep.subr.mxu0 0.0
  %401 = vmatpush1.msra.mxu0 %v114
  %402 = vmatprep.subr.mxu0 0.0
  %403 = vmatpush1.msra.mxu0 %v115
  %404 = vmatprep.subr.mxu0 0.0
  %405 = vmatpush1.msra.mxu0 %v116
  %406 = vmatprep.subr.mxu0 0.0
  %407 = vmatpush1.msra.mxu0 %v117
  %408 = vmatprep.subr.mxu0 0.0
  %409 = vmatpush1.msra.mxu0 %v118
  %410 = vmatprep.subr.mxu0 0.0
  %411 = vmatpush1.msra.mxu0 %v119
  %412 = vmatprep.subr.mxu0 0.0
  %413 = vmatpush1.msra.mxu0 %v120
  %414 = vmatprep.subr.mxu0 0.0
  %415 = vmatpush1.msra.mxu0 %v121
  %416 = vmatprep.subr.mxu0 0.0
  %417 = vmatpush1.msra.mxu0 %v122
  %418 = vmatprep.subr.mxu0 0.0
  %419 = vmatpush1.msra.mxu0 %v123
  %420 = vmatprep.subr.mxu0 0.0
  %421 = vmatpush1.msra.mxu0 %v124
  %422 = vmatprep.subr.mxu0 0.0
  %423 = vmatpush1.msra.mxu0 %v125
  %424 = vmatprep.subr.mxu0 0.0
  %425 = vmatpush1.msra.mxu0 %v126
  %426 = vmatprep.subr.mxu0 0.0
  %427 = vmatpush1.msra.mxu0 %v127
  %428 = vmatprep.mubr.f32.mxu0 %v25
  %429 = vmatmul.mubr.f32.gmra.mrb[0].mxu0 %v24
  %v430 = vpop.f32.mrb[0].mxu0
  %v431 = vadd.f32 %v361, %v430
  %v432 = vpop.f32.mrb[0].mxu0
  %433 = vdwg.mxu0
  %434 = vmatprep.subr.mxu0 0.0
  %435 = vmatpush1.msra.mxu0 %v128
  %436 = vmatprep.subr.mxu0 0.0
  %437 = vmatpush1.msra.mxu0 %v129
  %438 = vmatprep.subr.mxu0 0.0
  %439 = vmatpush1.msra.mxu0 %v130
  %440 = vmatprep.subr.mxu0 0.0
  %441 = vmatpush1.msra.mxu0 %v131
  %442 = vmatprep.subr.mxu0 0.0
  %443 = vmatpush1.msra.mxu0 %v132
  %444 = vmatprep.subr.mxu0 0.0
  %445 = vmatpush1.msra.mxu0 %v133
  %446 = vmatprep.subr.mxu0 0.0
  %447 = vmatpush1.msra.mxu0 %v134
  %448 = vmatprep.subr.mxu0 0.0
  %449 = vmatpush1.msra.mxu0 %v135
  %450 = vmatprep.subr.mxu0 0.0
  %451 = vmatpush1.msra.mxu0 %v136
  %452 = vmatprep.subr.mxu0 0.0
  %453 = vmatpush1.msra.mxu0 %v137
  %454 = vmatprep.subr.mxu0 0.0
  %455 = vmatpush1.msra.mxu0 %v138
  %456 = vmatprep.subr.mxu0 0.0
  %457 = vmatpush1.msra.mxu0 %v139
  %458 = vmatprep.subr.mxu0 0.0
  %459 = vmatpush1.msra.mxu0 %v140
  %460 = vmatprep.subr.mxu0 0.0
  %461 = vmatpush1.msra.mxu0 %v141
  %462 = vmatprep.subr.mxu0 0.0
  %463 = vmatpush1.msra.mxu0 %v142
  %464 = vmatprep.subr.mxu0 0.0
  %465 = vmatpush1.msra.mxu0 %v143
  %466 = vmatprep.subr.mxu0 0.0
  %467 = vmatpush1.msra.mxu0 %v144
  %468 = vmatprep.subr.mxu0 0.0
  %469 = vmatpush1.msra.mxu0 %v145
  %470 = vmatprep.subr.mxu0 0.0
  %471 = vmatpush1.msra.mxu0 %v146
  %472 = vmatprep.subr.mxu0 0.0
  %473 = vmatpush1.msra.mxu0 %v147
  %474 = vmatprep.subr.mxu0 0.0
  %475 = vmatpush1.msra.mxu0 %v148
  %476 = vmatprep.subr.mxu0 0.0
  %477 = vmatpush1.msra.mxu0 %v149
  %478 = vmatprep.subr.mxu0 0.0
  %479 = vmatpush1.msra.mxu0 %v150
  %480 = vmatprep.subr.mxu0 0.0
  %481 = vmatpush1.msra.mxu0 %v151
  %482 = vmatprep.subr.mxu0 0.0
  %483 = vmatpush1.msra.mxu0 %v152
  %484 = vmatprep.subr.mxu0 0.0
  %485 = vmatpush1.msra.mxu0 %v153
  %486 = vmatprep.subr.mxu0 0.0
  %487 = vmatpush1.msra.mxu0 %v154
  %488 = vmatprep.subr.mxu0 0.0
  %489 = vmatpush1.msra.mxu0 %v155
  %490 = vmatprep.subr.mxu0 0.0
  %491 = vmatpush1.msra.mxu0 %v156
  %492 = vmatprep.subr.mxu0 0.0
  %493 = vmatpush1.msra.mxu0 %v157
  %494 = vmatprep.subr.mxu0 0.0
  %495 = vmatpush1.msra.mxu0 %v158
  %496 = vmatprep.subr.mxu0 0.0
  %497 = vmatpush1.msra.mxu0 %v159
  %498 = vmatprep.mubr.f32.mxu0 %v27
  %499 = vmatmul.mubr.f32.gmra.mrb[0].mxu0 %v26
  %v500 = vpop.f32.mrb[0].mxu0
  %v501 = vadd.f32 %v431, %v500
  %v502 = vpop.f32.mrb[0].mxu0
  %503 = vdwg.mxu0
  %504 = vmatprep.subr.mxu0 0.0
  %505 = vmatpush1.msra.mxu0 %v160
  %506 = vmatprep.subr.mxu0 0.0
  %507 = vmatpush1.msra.mxu0 %v161
  %508 = vmatprep.subr.mxu0 0.0
  %509 = vmatpush1.msra.mxu0 %v162
  %510 = vmatprep.subr.mxu0 0.0
  %511 = vmatpush1.msra.mxu0 %v163
  %512 = vmatprep.subr.mxu0 0.0
  %513 = vmatpush1.msra.mxu0 %v164
  %514 = vmatprep.subr.mxu0 0.0
  %515 = vmatpush1.msra.mxu0 %v165
  %516 = vmatprep.subr.mxu0 0.0
  %517 = vmatpush1.msra.mxu0 %v166
  %518 = vmatprep.subr.mxu0 0.0
  %519 = vmatpush1.msra.mxu0 %v167
  %520 = vmatprep.subr.mxu0 0.0
  %521 = vmatpush1.msra.mxu0 %v168
  %522 = vmatprep.subr.mxu0 0.0
  %523 = vmatpush1.msra.mxu0 %v169
  %524 = vmatprep.subr.mxu0 0.0
  %525 = vmatpush1.msra.mxu0 %v170
  %526 = vmatprep.subr.mxu0 0.0
  %527 = vmatpush1.msra.mxu0 %v171
  %528 = vmatprep.subr.mxu0 0.0
  %529 = vmatpush1.msra.mxu0 %v172
  %530 = vmatprep.subr.mxu0 0.0
  %531 = vmatpush1.msra.mxu0 %v173
  %532 = vmatprep.subr.mxu0 0.0
  %533 = vmatpush1.msra.mxu0 %v174
  %534 = vmatprep.subr.mxu0 0.0
  %535 = vmatpush1.msra.mxu0 %v175
  %536 = vmatprep.subr.mxu0 0.0
  %537 = vmatpush1.msra.mxu0 %v176
  %538 = vmatprep.subr.mxu0 0.0
  %539 = vmatpush1.msra.mxu0 %v177
  %540 = vmatprep.subr.mxu0 0.0
  %541 = vmatpush1.msra.mxu0 %v178
  %542 = vmatprep.subr.mxu0 0.0
  %543 = vmatpush1.msra.mxu0 %v179
  %544 = vmatprep.subr.mxu0 0.0
  %545 = vmatpush1.msra.mxu0 %v180
  %546 = vmatprep.subr.mxu0 0.0
  %547 = vmatpush1.msra.mxu0 %v181
  %548 = vmatprep.subr.mxu0 0.0
  %549 = vmatpush1.msra.mxu0 %v182
  %550 = vmatprep.subr.mxu0 0.0
  %551 = vmatpush1.msra.mxu0 %v183
  %552 = vmatprep.subr.mxu0 0.0
  %553 = vmatpush1.msra.mxu0 %v184
  %554 = vmatprep.subr.mxu0 0.0
  %555 = vmatpush1.msra.mxu0 %v185
  %556 = vmatprep.subr.mxu0 0.0
  %557 = vmatpush1.msra.mxu0 %v186
  %558 = vmatprep.subr.mxu0 0.0
  %559 = vmatpush1.msra.mxu0 %v187
  %560 = vmatprep.subr.mxu0 0.0
  %561 = vmatpush1.msra.mxu0 %v188
  %562 = vmatprep.subr.mxu0 0.0
  %563 = vmatpush1.msra.mxu0 %v189
  %564 = vmatprep.subr.mxu0 0.0
  %565 = vmatpush1.msra.mxu0 %v190
  %566 = vmatprep.subr.mxu0 0.0
  %567 = vmatpush1.msra.mxu0 %v191
  %568 = vmatprep.mubr.f32.mxu0 %v29
  %569 = vmatmul.mubr.f32.gmra.mrb[0].mxu0 %v28
  %v570 = vpop.f32.mrb[0].mxu0
  %v571 = vadd.f32 %v501, %v570
  %v572 = vpop.f32.mrb[0].mxu0
  %573 = vdwg.mxu0
  %574 = vmatprep.subr.mxu0 0.0
  %575 = vmatpush1.msra.mxu0 %v192
  %576 = vmatprep.subr.mxu0 0.0
  %577 = vmatpush1.msra.mxu0 %v193
  %578 = vmatprep.subr.mxu0 0.0
  %579 = vmatpush1.msra.mxu0 %v194
  %580 = vmatprep.subr.mxu0 0.0
  %581 = vmatpush1.msra.mxu0 %v195
  %582 = vmatprep.subr.mxu0 0.0
  %583 = vmatpush1.msra.mxu0 %v196
  %584 = vmatprep.subr.mxu0 0.0
  %585 = vmatpush1.msra.mxu0 %v197
  %586 = vmatprep.subr.mxu0 0.0
  %587 = vmatpush1.msra.mxu0 %v198
  %588 = vmatprep.subr.mxu0 0.0
  %589 = vmatpush1.msra.mxu0 %v199
  %590 = vmatprep.subr.mxu0 0.0
  %591 = vmatpush1.msra.mxu0 %v200
  %592 = vmatprep.subr.mxu0 0.0
  %593 = vmatpush1.msra.mxu0 %v201
  %594 = vmatprep.subr.mxu0 0.0
  %595 = vmatpush1.msra.mxu0 %v202
  %596 = vmatprep.subr.mxu0 0.0
  %597 = vmatpush1.msra.mxu0 %v203
  %598 = vmatprep.subr.mxu0 0.0
  %599 = vmatpush1.msra.mxu0 %v204
  %600 = vmatprep.subr.mxu0 0.0
  %601 = vmatpush1.msra.mxu0 %v205
  %602 = vmatprep.subr.mxu0 0.0
  %603 = vmatpush1.msra.mxu0 %v206
  %604 = vmatprep.subr.mxu0 0.0
  %605 = vmatpush1.msra.mxu0 %v207
  %606 = vmatprep.subr.mxu0 0.0
  %607 = vmatpush1.msra.mxu0 %v208
  %608 = vmatprep.subr.mxu0 0.0
  %609 = vmatpush1.msra.mxu0 %v209
  %610 = vmatprep.subr.mxu0 0.0
  %611 = vmatpush1.msra.mxu0 %v210
  %612 = vmatprep.subr.mxu0 0.0
  %613 = vmatpush1.msra.mxu0 %v211
  %614 = vmatprep.subr.mxu0 0.0
  %615 = vmatpush1.msra.mxu0 %v212
  %616 = vmatprep.subr.mxu0 0.0
  %617 = vmatpush1.msra.mxu0 %v213
  %618 = vmatprep.subr.mxu0 0.0
  %619 = vmatpush1.msra.mxu0 %v214
  %620 = vmatprep.subr.mxu0 0.0
  %621 = vmatpush1.msra.mxu0 %v215
  %622 = vmatprep.subr.mxu0 0.0
  %623 = vmatpush1.msra.mxu0 %v216
  %624 = vmatprep.subr.mxu0 0.0
  %625 = vmatpush1.msra.mxu0 %v217
  %626 = vmatprep.subr.mxu0 0.0
  %627 = vmatpush1.msra.mxu0 %v218
  %628 = vmatprep.subr.mxu0 0.0
  %629 = vmatpush1.msra.mxu0 %v219
  %630 = vmatprep.subr.mxu0 0.0
  %631 = vmatpush1.msra.mxu0 %v220
  %632 = vmatprep.subr.mxu0 0.0
  %633 = vmatpush1.msra.mxu0 %v221
  %634 = vmatprep.subr.mxu0 0.0
  %635 = vmatpush1.msra.mxu0 %v222
  %636 = vmatprep.subr.mxu0 0.0
  %637 = vmatpush1.msra.mxu0 %v223
  %638 = vmatprep.mubr.f32.mxu0 %v31
  %639 = vmatmul.mubr.f32.gmra.mrb[0].mxu0 %v30
  %v640 = vpop.f32.mrb[0].mxu0
  %v641 = vadd.f32 %v571, %v640
  %v642 = vpop.f32.mrb[0].mxu0
  %643 = vdwg.mxu0
  %v644 = vadd.f32 %v19, %v641
  %645 = vst [vmem:[#allocation2] sm:$0xff] %v644
  // Predicated region
  $region18: #{attention_forward.1} parent=0 // pred_check
    %p646 = pneg %p14
  $region19: #{attention_forward.1} parent=0 // pred_check_branch
    %648 = sbr.rel (%p646) target = $region21
  $region20: #{attention_forward.1} parent=0 // pred_region
    %v649 = vld [vmem:[#allocation2] sm:$0xff]
    %v650 = vld [vmem:[%s2] sm:$0x1]
    %v652 = vlaneseq
    %v653 = vshrl.u32 %v652, 7
    %v654 = vsub.s32 0, %v653
    %v655 = vrot.slane %v650, %v654
    %v657 = vadd.f32 %v649, %v655
    %658 = vmax.xlane.f32.xlu0 %v657
    %v659 = vpop.xlane.xlu0 %658
    %v660 = vsub.f32 %v657, %v659
    %v661 = vmul.f32 %v660, 1.442695
    %v662 = vpow.pop %v661
    %663 = vadd.xlane.f32.xlu0 %v662
    %v664 = vpop.xlane.xlu0 %663
    %v665 = vrcp.pop %v664
    %v666 = vmul.f32 %v662, %v665
    %667 = vst [vmem:[%s3] sm:$0xff] %v666
  $region21: #{attention_forward.1} parent=0 // pred_fallthru
    _
  // Predicated region
  $region22: #{attention_forward.1} parent=0 // pred_check
    _
  $region23: #{attention_forward.1} parent=0 // pred_check_branch
    %669 = sbr.rel (0) target = $region25
  $region24: #{attention_forward.1} parent=0 // pred_region
    _
  $region25: #{attention_forward.1} parent=0 // pred_fallthru
    _
  // Predicated region
  $region26: #{attention_forward.1} parent=0 // pred_check
    _
  $region27: #{attention_forward.1} parent=0 // pred_check_branch
    %671 = sbr.rel (0) target = $region29
  $region28: #{attention_forward.1} parent=0 // pred_region
    _
  $region29: #{attention_forward.1} parent=0 // pred_fallthru
    _

</llo_original>
